<compile_context>
chip_gen: v7x
topology: tpu7x:2x2x1
jax: 0.10.0
libtpu: 0.0.40
codegen_flags: <defaults>
</compile_context>

<pallas_src>
import functools

import jax
import jax.numpy as jnp
from jax.experimental import pallas as pl
from jax.experimental.pallas import tpu as pltpu

EPS = 1e-6  # rms_norm epsilon


def _token_norm_kernel(x_ref, mean_ref, o_ref, *, d, inv_d):
    # x_ref:    (ROWS_PER_TILE, D) tile of tokens (input dtype)
    # mean_ref: (1, D) running token mean, already f32 (broadcast over rows)
    # o_ref:    (ROWS_PER_TILE, D) output tile
    x = x_ref[...].astype(jnp.float32)
    xc = x - mean_ref[...]
    sq = xc * xc
    if d % 128 != 0:
        # Physical lane padding (lanes >= d) holds undefined data in VMEM; zero it
        # before the lane reduction so the mean-of-squares is exact.
        lane = jax.lax.broadcasted_iota(jnp.int32, sq.shape, 1)
        sq = jnp.where(lane < d, sq, 0.0)
    ss = jnp.sum(sq, axis=-1, keepdims=True)       # mean over the REAL D
    inv = jax.lax.rsqrt(ss * inv_d + EPS)
    o_ref[...] = (xc * inv).astype(o_ref.dtype)    # store is clipped to D lanes / valid rows


def _round_up(x: int, m: int) -> int:
    return ((x + m - 1) // m) * m


def _vmem_capacity_bytes() -> int:
    try:
        cap = int(pltpu.get_tpu_info().vmem_capacity_bytes)
        if cap > 0:
            return cap
    except Exception:
        pass
    return 64 * 1024 * 1024  # conservative fallback (v7x per-TC VMEM)


def _pick_rows_per_tile(n_rows: int, d: int, itemsize: int, vmem_cap: int) -> int:
    # Sublane packing for the input dtype: f32 -> 8, bf16 -> 16, int8/fp8 -> 32.
    pack = max(8, 32 // itemsize)
    if n_rows <= pack:
        # Full-array block: exempt from the 8-sublane divisibility rule, no padding.
        return n_rows
    d_lanes = _round_up(d, 128)                 # physical lane footprint in VMEM
    # Working-set budget: ~64 MiB on 128 MiB parts (v5e/v6e), ~32 MiB on 64 MiB v7x.
    budget = min(vmem_cap // 2, 64 * 1024 * 1024)
    # Per row per step: in + out double-buffered in x.dtype, plus ~2 full-tile f32 temps.
    bytes_per_row = d_lanes * (4 * itemsize + 2 * 4)
    rows = max(pack, budget // max(bytes_per_row, 1))
    rows = min(rows, 2048)
    # Guarantee >= 2 grid steps so both v7x TensorCores get work on the parallel axis.
    rows = min(rows, _round_up(-(-n_rows // 2), pack))
    rows = max(pack, (rows // pack) * pack)
    return int(rows)


def token_norm(x: jax.Array, mean: jax.Array) -> jax.Array:
    """x: (B, T, D); mean: (1, 1, D) running token mean. Returns (B, T, D), dtype of x."""
    B, T, D = x.shape
    n_rows = B * T
    itemsize = jnp.dtype(x.dtype).itemsize
    vmem_cap = _vmem_capacity_bytes()

    rows_per_tile = _pick_rows_per_tile(n_rows, D, itemsize, vmem_cap)
    grid = (pl.cdiv(n_rows, rows_per_tile),)

    # Wrapper-side layout plumbing only: flatten tokens (free reshape), no padding.
    x2d = x.reshape(n_rows, D)
    mean2d = mean.reshape(1, D).astype(jnp.float32)

    # Explicit VMEM ceiling for the chosen tile (in/out double-buffered + f32 temps).
    d_lanes = _round_up(D, 128)
    tile_elems = rows_per_tile * d_lanes
    needed = (2 * tile_elems * itemsize        # input, double-buffered
              + 2 * tile_elems * itemsize      # output, double-buffered
              + 3 * tile_elems * 4             # f32 intermediates + slack
              + 2 * d_lanes * 8 * 4)           # resident mean block (sublane padded)
    vmem_limit = int(min(max(needed + (8 << 20), 32 << 20), (vmem_cap * 3) // 4))

    cost = pl.CostEstimate(
        flops=4 * n_rows * D,
        transcendentals=n_rows,
        bytes_accessed=2 * n_rows * D * itemsize + D * 4,
    )

    kernel = functools.partial(_token_norm_kernel, d=D, inv_d=1.0 / float(D))

    out2d = pl.pallas_call(
        kernel,
        out_shape=jax.ShapeDtypeStruct((n_rows, D), x.dtype),
        grid_spec=pltpu.PrefetchScalarGridSpec(
            num_scalar_prefetch=0,
            grid=grid,
            in_specs=[
                pl.BlockSpec((rows_per_tile, D), lambda i: (i, 0)),
                pl.BlockSpec((1, D), lambda i: (0, 0)),   # resident across grid steps
            ],
            out_specs=pl.BlockSpec((rows_per_tile, D), lambda i: (i, 0)),
        ),
        compiler_params=pltpu.CompilerParams(
            dimension_semantics=("parallel",),
            vmem_limit_bytes=vmem_limit,
        ),
        cost_estimate=cost,
    )(x2d, mean2d)

    return out2d.reshape(B, T, D)


def token_norm_ref(x, mean):
    xc = x.astype(jnp.float32) - mean.astype(jnp.float32)
    ms = jnp.mean(xc * xc, axis=-1, keepdims=True)
    return (xc * jax.lax.rsqrt(ms + EPS)).astype(x.dtype)


if __name__ == "__main__":
    B, T, D = 2, 8, 32
    key = jax.random.PRNGKey(0)
    x = jax.random.normal(key, (B, T, D), dtype=jnp.float32)

    # Deterministic buffer init, matching the module's __init__ (zeros of shape (1, 1, dim)).
    mean = jnp.zeros((1, 1, D), dtype=jnp.float32)

    y = token_norm(x, mean)
    y = jax.block_until_ready(y)

    y_ref = token_norm_ref(x, mean)
    assert y.shape == (B, T, D)
    assert jnp.allclose(y, y_ref, atol=1e-5, rtol=1e-5)

    # Unaligned D (200) + ragged last row-block (21 rows) with a non-zero running mean.
    B2, T2, D2 = 3, 7, 200
    x2 = jax.random.normal(jax.random.PRNGKey(1), (B2, T2, D2), dtype=jnp.float32)
    mean2 = 0.1 * jax.random.normal(jax.random.PRNGKey(2), (1, 1, D2), dtype=jnp.float32)
    y2 = jax.block_until_ready(token_norm(x2, mean2))
    assert jnp.allclose(y2, token_norm_ref(x2, mean2), atol=1e-5, rtol=1e-5)

    # Tiny input (n_rows < sublane pack): single full-array block, unaligned D.
    B3, T3, D3 = 1, 3, 200
    x3 = jax.random.normal(jax.random.PRNGKey(3), (B3, T3, D3), dtype=jnp.float32)
    mean3 = 0.05 * jax.random.normal(jax.random.PRNGKey(4), (1, 1, D3), dtype=jnp.float32)
    y3 = jax.block_until_ready(token_norm(x3, mean3))
    assert jnp.allclose(y3, token_norm_ref(x3, mean3), atol=1e-5, rtol=1e-5)

    # bfloat16 path (pack=16), unaligned D.
    B4, T4, D4 = 2, 16, 96
    x4 = jax.random.normal(jax.random.PRNGKey(5), (B4, T4, D4), dtype=jnp.bfloat16)
    mean4 = (0.1 * jax.random.normal(jax.random.PRNGKey(6), (1, 1, D4))).astype(jnp.float32)
    y4 = jax.block_until_ready(token_norm(x4, mean4))
    y4_ref = token_norm_ref(x4, mean4)
    assert jnp.allclose(y4.astype(jnp.float32), y4_ref.astype(jnp.float32), atol=3e-2, rtol=3e-2)

    print("KERNEL_OK")
</pallas_src>

<mosaic_0001>
module attributes {stable_mosaic.version = 11 : i64} {
  func.func @_token_norm_kernel(%arg0: i32, %arg1: memref<8x32xf32, #tpu.memory_space<vmem>>, %arg2: memref<1x32xf32, #tpu.memory_space<vmem>>, %arg3: memref<8x32xf32, #tpu.memory_space<vmem>>) attributes {dimension_semantics = [#tpu.dimension_semantics<parallel>], iteration_bounds = array<i64: 2>, scalar_prefetch = 0 : i64, scratch_operands = 0 : i64, tpu.core_type = #tpu.core_type<tc>, window_params = [{transform_indices = @transform_0, window_bounds = array<i64: 8, 32>}, {pipeline_mode = #tpu.pipeline_mode<synchronous>, transform_indices = @transform_1, window_bounds = array<i64: 1, 32>}, {transform_indices = @transform_2, window_bounds = array<i64: 8, 32>}]} {
    %c0 = arith.constant 0 : index
    %c0_0 = arith.constant 0 : index
    %0 = vector.load %arg1[%c0, %c0_0] : memref<8x32xf32, #tpu.memory_space<vmem>>, vector<8x32xf32>
    %c0_1 = arith.constant 0 : index
    %c0_2 = arith.constant 0 : index
    %1 = vector.load %arg2[%c0_1, %c0_2] : memref<1x32xf32, #tpu.memory_space<vmem>>, vector<1x32xf32>
    %2 = vector.broadcast %1 : vector<1x32xf32> to vector<8x32xf32>
    %3 = arith.subf %0, %2 : vector<8x32xf32>
    %4 = arith.mulf %3, %3 : vector<8x32xf32>
    %5 = tpu.iota {dimensions = array<i32: 1>} : vector<8x32xi32>
    %c32_i32 = arith.constant 32 : i32
    %6 = vector.broadcast %c32_i32 : i32 to vector<8x32xi32>
    %7 = arith.cmpi slt, %5, %6 : vector<8x32xi32>
    %cst = arith.constant 0.000000e+00 : f32
    %8 = vector.broadcast %cst : f32 to vector<8x32xf32>
    %9 = arith.select %7, %4, %8 : vector<8x32xi1>, vector<8x32xf32>
    %cst_3 = arith.constant dense<0.000000e+00> : vector<8xf32>
    %10 = vector.multi_reduction <add>, %9, %cst_3 [1] : vector<8x32xf32> to vector<8xf32>
    %11 = vector.shape_cast %10 : vector<8xf32> to vector<8x1xf32>
    %cst_4 = arith.constant 3.125000e-02 : f32
    %12 = vector.broadcast %cst_4 : f32 to vector<8x1xf32>
    %13 = arith.mulf %11, %12 : vector<8x1xf32>
    %cst_5 = arith.constant 9.99999997E-7 : f32
    %14 = vector.broadcast %cst_5 : f32 to vector<8x1xf32>
    %15 = arith.addf %13, %14 : vector<8x1xf32>
    %16 = math.rsqrt %15 : vector<8x1xf32>
    %17 = vector.broadcast %16 : vector<8x1xf32> to vector<8x32xf32>
    %18 = arith.mulf %3, %17 : vector<8x32xf32>
    %c0_6 = arith.constant 0 : index
    %c0_7 = arith.constant 0 : index
    %19 = vector.load %arg3[%c0_6, %c0_7] : memref<8x32xf32, #tpu.memory_space<vmem>>, vector<8x32xf32>
    tpu.vector_store %arg3[%c0_6, %c0_7], %18 {strides = array<i32>} : memref<8x32xf32, #tpu.memory_space<vmem>>, vector<8x32xf32>,
    return
  }
  func.func @transform_0(%arg0: i32) -> (i32, i32) {
    %c0_i32 = arith.constant 0 : i32
    %c0_i32_0 = arith.constant 0 : i32
    return %arg0, %c0_i32 : i32, i32
  }
  func.func @transform_1(%arg0: i32) -> (i32, i32) {
    %c0_i32 = arith.constant 0 : i32
    %c0_i32_0 = arith.constant 0 : i32
    %c0_i32_1 = arith.constant 0 : i32
    return %c0_i32, %c0_i32_0 : i32, i32
  }
  func.func @transform_2(%arg0: i32) -> (i32, i32) {
    %c0_i32 = arith.constant 0 : i32
    %c0_i32_0 = arith.constant 0 : i32
    return %arg0, %c0_i32 : i32, i32
  }
}

</mosaic_0001>

<llo_original>
// kernel: tpu_custom_call.1
$region0: #{tpu_custom_call.1}
  #allocation0 [shape = 'u32[]', space=smem, size = 0x4, offset = 0x4, fixed_abs, tag = 'smem constant byte address 0x4 - core index']
  #allocation1 [shape = 'u32[144,128]{1,0:T(1,128)}', space=vmem, size = 0x12000, scoped, tag = 'internal scratch']
  %s0 = inlined_call_operand.hbm [shape: f32[16,32], index: 0, kind: input, shape index: {}]
  %s1 = inlined_call_operand.vmem [shape: f32[1,32], index: 1, kind: input, shape index: {}]
  %s2 = inlined_call_operand.hbm [shape: f32[16,32], index: 2, kind: output, shape index: {}]
  %s3 = sld [smem:[#allocation0]]
  $region45: #{tpu_custom_call.1} parent=0
    _
  %s5 = ssub.s32 1, %s3
  %s6 = scalar_select 0, %s5, %s3
  $region1: #{tpu_custom_call.1} parent=0
    #allocation2 [shape = 'u8[8192]{0}', space=vmem, size = 0x2000, scoped, tag = 'input window, operand 0']
    #allocation3 [shape = 's32[2]{0}', space=sflag, size = 0x8, scoped, tag = 'scoped memory for tpu_custom_call.1']
    #allocation4 [shape = 's32[2]{0}', space=sflag, size = 0x8, scoped, tag = 'scoped memory for tpu_custom_call.1']
    #allocation5 [shape = 'u8[8192]{0}', space=vmem, size = 0x2000, scoped, tag = 'output window, operand 0']
    %7 = vsyncpa [#allocation3], 0
    %s8 = scalar_lea.sflag [#allocation3], 1
    %9 = vsyncpa %s8, 0
    %10 = vsyncpa [#allocation4], 0
    %s11 = scalar_lea.sflag [#allocation4], 1
    %12 = vsyncpa %s11, 0
    loop: start=0, step=1, limit=4
    $region2: #{tpu_custom_call.1} parent=1 // loop_pre_header
      _
    $region3: #{tpu_custom_call.1} parent=1 // loop_header
      %s14 = sphi 0, %s18
      %p15 = scmp.ge.s32.totalorder %s14, 4
      %s24 = sphi 0, %s26
      %s27 = sphi 0, %s24
      %s28 = sphi 0, %s27
      %s44 = sphi 0, %s28
      %s48 = sphi 0, %s48
      %s50 = sphi 0, %s48
      %s51 = sphi 0, %s50
      %s65 = sphi 0, %s51
      %s71 = sphi 0, %s73
      %s74 = sphi 0, %s71
      %s75 = sphi 0, %s74
      %s91 = sphi 0, %s75
    $region4: #{tpu_custom_call.1} parent=1 // loop_header_branch
      %17 = sbr.rel (%p15) target = $region8
    $region5: #{tpu_custom_call.1} parent=1 // loop_body
      %s19 = ssub.s32 %s14, 1
      %s20 = ssub.s32 %s14, 2
      %s21 = sadd.s32 %s14, 1
      %s22 = ssub.s32 %s14, %s21
      %p23 = scmp.eq.s32.totalorder %s22, 0
      %s25 = sadd.s32 %s24, 1
      %s26 = scalar_select %p23, %s24, %s25
      %p29 = pneg %p23
      %p30 = scmp.eq.s32.totalorder %s14, 1
      %p31 = por %p29, %p30
      %p32 = scmp.ne.s32.totalorder %s24, %s27
      %p33 = scmp.eq.s32.totalorder %s14, 0
      %p34 = por %p32, %p33
      %p35 = scmp.ne.s32.totalorder %s24, %s27
      %p36 = scmp.eq.s32.totalorder %s19, 1
      %p37 = por %p35, %p36
      %p38 = scmp.ne.s32.totalorder %s27, %s28
      %p39 = scmp.eq.s32.totalorder %s19, 0
      %p40 = por %p38, %p39
      %p41 = scmp.ne.s32.totalorder %s27, %s28
      %p42 = scmp.eq.s32.totalorder %s20, 1
      %p43 = por %p41, %p42
      %p45 = scmp.ne.s32.totalorder %s28, %s44
      %p46 = scmp.eq.s32.totalorder %s20, 0
      %p47 = por %p45, %p46
      %s49 = sadd.s32 %s48, 1
      %p52 = scmp.eq.s32.totalorder %s14, 1
      %p53 = scmp.ne.s32.totalorder %s48, %s50
      %p54 = scmp.eq.s32.totalorder %s14, 0
      %p55 = por %p53, %p54
      %p56 = scmp.ne.s32.totalorder %s48, %s50
      %p57 = scmp.eq.s32.totalorder %s19, 1
      %p58 = por %p56, %p57
      %p59 = scmp.ne.s32.totalorder %s50, %s51
      %p60 = scmp.eq.s32.totalorder %s19, 0
      %p61 = por %p59, %p60
      %p62 = scmp.ne.s32.totalorder %s50, %s51
      %p63 = scmp.eq.s32.totalorder %s20, 1
      %p64 = por %p62, %p63
      %p66 = scmp.ne.s32.totalorder %s51, %s65
      %p67 = scmp.eq.s32.totalorder %s20, 0
      %p68 = por %p66, %p67
      %s69 = ssub.s32 %s14, %s21
      %p70 = scmp.eq.s32.totalorder %s69, 0
      %s72 = sadd.s32 %s71, 1
      %s73 = scalar_select %p70, %s71, %s72
      %p76 = pneg %p70
      %p77 = scmp.eq.s32.totalorder %s14, 1
      %p78 = por %p76, %p77
      %p79 = scmp.ne.s32.totalorder %s71, %s74
      %p80 = scmp.eq.s32.totalorder %s14, 0
      %p81 = por %p79, %p80
      %p82 = scmp.ne.s32.totalorder %s71, %s74
      %p83 = scmp.eq.s32.totalorder %s19, 1
      %p84 = por %p82, %p83
      %p85 = scmp.ne.s32.totalorder %s74, %s75
      %p86 = scmp.eq.s32.totalorder %s19, 0
      %p87 = por %p85, %p86
      %p88 = scmp.ne.s32.totalorder %s74, %s75
      %p89 = scmp.eq.s32.totalorder %s20, 1
      %p90 = por %p88, %p89
      %p92 = scmp.ne.s32.totalorder %s75, %s91
      %p93 = scmp.eq.s32.totalorder %s20, 0
      %p94 = por %p92, %p93
      %p95 = scmp.le.s32.totalorder 1, %s14
      %p96 = scmp.lt.s32.totalorder %s14, 3
      %p97 = pnand %p95, %p96
      %p98 = pneg %p97
      // Predicated region
      $region9: #{tpu_custom_call.1} parent=5 // pred_check
        _
      $region10: #{tpu_custom_call.1} parent=5 // pred_check_branch
        %100 = sbr.rel (%p97) target = $region12
      $region11: #{tpu_custom_call.1} parent=5 // pred_region
        %s101 = ssub.s32 %s14, 1
        // Predicated region
        $region13: #{tpu_custom_call.1} parent=11 // pred_check
          %p102 = pneg %p61
        $region14: #{tpu_custom_call.1} parent=11 // pred_check_branch
          %104 = sbr.rel (%p102) target = $region16
        $region15: #{tpu_custom_call.1} parent=11 // pred_region
          _
        $region16: #{tpu_custom_call.1} parent=11 // pred_fallthru
          _
      $region12: #{tpu_custom_call.1} parent=5 // pred_fallthru
        _
      %p105 = scmp.lt.s32.totalorder %s14, 2
      // Predicated region
      $region17: #{tpu_custom_call.1} parent=5 // pred_check
        %p106 = pneg %p105
      $region18: #{tpu_custom_call.1} parent=5 // pred_check_branch
        %108 = sbr.rel (%p106) target = $region20
      $region19: #{tpu_custom_call.1} parent=5 // pred_region
        // Predicated region
        $region21: #{tpu_custom_call.1} parent=19 // pred_check
          %p109 = pneg %p34
        $region22: #{tpu_custom_call.1} parent=19 // pred_check_branch
          %111 = sbr.rel (%p109) target = $region24
        $region23: #{tpu_custom_call.1} parent=19 // pred_region
          %s112 = sand.u32 %s24, 1
          %s113 = scalar_lea.sflag [#allocation3], %s112
          %s114 = sand.u32 %s24, 1
          %s115 = smul.addr %s114, 8
          %s116 = scalar_lea.vmem [#allocation2], %s115
          %s118 = ssub.s32 128, 128
          %119 = vsyncadd %s113, %s118
          %s120 = smul.addr %s14, 128
          %s121 = scalar_lea.hbm %s0, %s120
          %s123 = sshll.u32 %s116, 4
          %s124 = int_to_ptr.vmem [resolvable:$true] %s123
          %126 = dma.hbm_to_vmem [thread:$0]  %s121, 128, %s124, %s113
        $region24: #{tpu_custom_call.1} parent=19 // pred_fallthru
          _
      $region20: #{tpu_custom_call.1} parent=5 // pred_fallthru
        _
      %p127 = scmp.le.s32.totalorder 1, %s14
      %p128 = scmp.lt.s32.totalorder %s14, 3
      %p129 = pnand %p127, %p128
      %p130 = pneg %p129
      // Predicated region
      $region25: #{tpu_custom_call.1} parent=5 // pred_check
        _
      $region26: #{tpu_custom_call.1} parent=5 // pred_check_branch
        %132 = sbr.rel (%p129) target = $region28
      $region27: #{tpu_custom_call.1} parent=5 // pred_region
        %s133 = ssub.s32 %s14, 1
        %s134 = sand.u32 %s27, 1
        %s135 = scalar_lea.sflag [#allocation3], %s134
        %s136 = sand.u32 %s27, 1
        %s137 = smul.addr %s136, 8
        %s138 = scalar_lea.vmem [#allocation2], %s137
        // Predicated region
        $region29: #{tpu_custom_call.1} parent=27 // pred_check
          %p139 = pneg %p40
        $region30: #{tpu_custom_call.1} parent=27 // pred_check_branch
          %141 = sbr.rel (%p139) target = $region32
        $region31: #{tpu_custom_call.1} parent=27 // pred_region
          %142 = dma.done %s135, 128
        $region32: #{tpu_custom_call.1} parent=27 // pred_fallthru
          _
        %s143 = sand.u32 %s27, 1
        %s144 = scalar_lea.sflag [#allocation3], %s143
        %s145 = sand.u32 %s27, 1
        %s146 = smul.addr %s145, 8
        %s147 = scalar_lea.vmem [#allocation2], %s146
        %p148 = pneg %p40
        %p149 = pneg %p37
        %p150 = pneg %p61
        %p151 = pneg %p58
        %p152 = pneg %p87
        %p153 = pneg %p84
        %s154 = sand.u32 %s74, 1
        %s155 = scalar_lea.sflag [#allocation4], %s154
        %s156 = sand.u32 %s74, 1
        %s157 = smul.addr %s156, 8
        %s158 = scalar_lea.vmem [#allocation5], %s157
        %v159 = vld [vmem:[%s138] sm:$0xff]
        %v160 = vld [vmem:[%s1] sm:$0x1]
        %v162 = vlaneseq
        %v163 = vshrl.u32 %v162, 7
        %v164 = vsub.s32 0, %v163
        %v165 = vrot.slane %v160, %v164
        %v167 = vsub.f32 %v159, %v165
        %v168 = vmul.f32 %v167, %v167
        %v169 = vlaneseq
        %v170 = vand.u32 %v169, 127
        %vm171 = vcmp.lt.s32.totalorder %v170, 32
        %v172 = vsel %vm171, %v168, 0.0
        %vm173 = vcmask 261120
        %v174 = vsel %vm173, %v172, 0.0
        %175 = vadd.xlane.f32.xlu0 %v174
        %v176 = vpop.xlane.xlu0 %175
        %v177 = vmul.f32 %v176, 0.03125
        %v178 = vadd.f32 %v177, 1e-06
        %v179 = vrsqrt.pop %v178
        %v180 = vmul.f32 %v167, %v179
        %181 = vst.msk [vmem:[%s158] sm:$0xff] %vm173, %v180
        %s182 = sand.u32 %s74, 1
        %s183 = scalar_lea.sflag [#allocation4], %s182
        %s184 = sand.u32 %s74, 1
        %s185 = smul.addr %s184, 8
        %s186 = scalar_lea.vmem [#allocation5], %s185
        // Predicated region
        $region33: #{tpu_custom_call.1} parent=27 // pred_check
          %p187 = pneg %p84
        $region34: #{tpu_custom_call.1} parent=27 // pred_check_branch
          %189 = sbr.rel (%p187) target = $region36
        $region35: #{tpu_custom_call.1} parent=27 // pred_region
          %s191 = ssub.s32 128, 128
          %192 = vsyncadd %s183, %s191
          %s193 = smul.addr %s19, 128
          %s194 = scalar_lea.hbm %s2, %s193
          %s196 = sshll.u32 %s186, 4
          %s197 = int_to_ptr.vmem [resolvable:$true] %s196
          %199 = dma.vmem_to_hbm [thread:$0]  %s197, 128, %s194, %s183
        $region36: #{tpu_custom_call.1} parent=27 // pred_fallthru
          _
      $region28: #{tpu_custom_call.1} parent=5 // pred_fallthru
        _
      %p200 = scmp.le.s32.totalorder 2, %s14
      // Predicated region
      $region37: #{tpu_custom_call.1} parent=5 // pred_check
        %p201 = pneg %p200
      $region38: #{tpu_custom_call.1} parent=5 // pred_check_branch
        %203 = sbr.rel (%p201) target = $region40
      $region39: #{tpu_custom_call.1} parent=5 // pred_region
        %s204 = ssub.s32 %s14, 2
        // Predicated region
        $region41: #{tpu_custom_call.1} parent=39 // pred_check
          %p205 = pneg %p90
        $region42: #{tpu_custom_call.1} parent=39 // pred_check_branch
          %207 = sbr.rel (%p205) target = $region44
        $region43: #{tpu_custom_call.1} parent=39 // pred_region
          %s208 = sand.u32 %s75, 1
          %s209 = scalar_lea.sflag [#allocation4], %s208
          %s210 = sand.u32 %s75, 1
          %s211 = smul.addr %s210, 8
          %s212 = scalar_lea.vmem [#allocation5], %s211
          %213 = dma.done %s209, 128
        $region44: #{tpu_custom_call.1} parent=39 // pred_fallthru
          _
      $region40: #{tpu_custom_call.1} parent=5 // pred_fallthru
        _
    $region6: #{tpu_custom_call.1} parent=1 // loop_footer
      %s18 = sadd.s32 1, %s14
    $region7: #{tpu_custom_call.1} parent=1 // loop_footer_branch
      %13 = sbr.rel target = $region3
    $region8: #{tpu_custom_call.1} parent=1 // loop_exit
      _
    %214 = vsyncpa [#allocation3], 1
    %s215 = scalar_lea.sflag [#allocation3], 1
    %216 = vsyncpa %s215, 1
    %217 = vsyncpa [#allocation4], 1
    %s218 = scalar_lea.sflag [#allocation4], 1
    %219 = vsyncpa %s218, 1

</llo_original>
